<compile_context>
chip_gen: v7x
topology: tpu7x:2x2x1
jax: 0.10.0
libtpu: 0.0.40
codegen_flags: <defaults>
</compile_context>

<pallas_src>
import jax
import jax.numpy as jnp
from jax.experimental import pallas as pl
from jax.experimental.pallas import tpu as pltpu


def _linear_sigmoid_kernel(x_ref, wb_ref, o_ref):
    # x_ref : (16, 1)  input column
    # wb_ref: (17, 8)  rows 0..15 = W^T, row 16 = bias
    # o_ref : (1, 8)   lane-major output row
    w_t = wb_ref[0:16, :]                                 # (16, 8) static view
    b_row = wb_ref[16:17, :]                              # (1, 8)  static view
    prod = w_t * x_ref[...]                               # VPU: lane-broadcast x -> (16, 8)
    acc = jnp.sum(prod, axis=0, keepdims=True) + b_row    # XLU sublane reduce -> (1, 8)
    o_ref[...] = jax.nn.sigmoid(acc).astype(o_ref.dtype)  # EUP


def pack_params(weight, bias):
    """One-time packing: (17, 8) = [W^T ; b].  weight: (8,16), bias: (8,)."""
    return jnp.concatenate([weight.T, bias[None, :]], axis=0).astype(jnp.float32)


@jax.jit
def linear_sigmoid(x1, wb_t):
    """x1: (16,), wb_t: (17, 8) packed params -> (8,)."""
    x_col = x1.reshape(16, 1)                            # bitcast, no data movement

    vmem_spec = pl.BlockSpec(memory_space=pltpu.MemorySpace.VMEM)
    cost = pl.CostEstimate(
        flops=2 * 16 * 8 + 8,                            # multiply-add + bias
        transcendentals=8,                               # sigmoid per output
        bytes_accessed=(16 + 17 * 8 + 8) * 4,
    )

    out = pl.pallas_call(
        _linear_sigmoid_kernel,
        out_shape=jax.ShapeDtypeStruct((1, 8), jnp.float32),
        in_specs=[vmem_spec, vmem_spec],
        out_specs=vmem_spec,
        cost_estimate=cost,
    )(x_col, wb_t)
    return out.reshape(-1)                               # bitcast -> (8,)


def _reference(x1, weight, bias):
    return jax.nn.sigmoid(x1 @ weight.T + bias)


if __name__ == "__main__":
    key = jax.random.PRNGKey(0)
    kx, kw, kb = jax.random.split(key, 3)

    # Deterministic synthetic params (shapes from nn.Linear(16, 8))
    x1 = jax.random.normal(kx, (16,), dtype=jnp.float32)
    weight = jax.random.normal(kw, (8, 16), dtype=jnp.float32) * 0.25
    bias = jax.random.normal(kb, (8,), dtype=jnp.float32) * 0.1

    wb_t = pack_params(weight, bias)                     # done once at init

    y = linear_sigmoid(x1, wb_t)
    jax.block_until_ready(y)

    y_ref = _reference(x1, weight, bias)
    assert y.shape == (8,)
    assert jnp.allclose(y, y_ref, atol=1e-5, rtol=1e-5)

    print("KERNEL_OK")
</pallas_src>

<mosaic_0001>
module attributes {stable_mosaic.version = 11 : i64} {
  func.func @_linear_sigmoid_kernel(%arg0: memref<16x1xf32, #tpu.memory_space<vmem>>, %arg1: memref<17x8xf32, #tpu.memory_space<vmem>>, %arg2: memref<1x8xf32, #tpu.memory_space<vmem>>) attributes {dimension_semantics = [], scalar_prefetch = 0 : i64, scratch_operands = 0 : i64, tpu.core_type = #tpu.core_type<tc>} {
    %c0 = arith.constant 0 : index
    %c0_0 = arith.constant 0 : index
    %0 = vector.load %arg1[%c0, %c0_0] : memref<17x8xf32, #tpu.memory_space<vmem>>, vector<16x8xf32>
    %c16 = arith.constant 16 : index
    %c0_1 = arith.constant 0 : index
    %1 = vector.load %arg1[%c16, %c0_1] : memref<17x8xf32, #tpu.memory_space<vmem>>, vector<1x8xf32>
    %c0_2 = arith.constant 0 : index
    %c0_3 = arith.constant 0 : index
    %2 = vector.load %arg0[%c0_2, %c0_3] : memref<16x1xf32, #tpu.memory_space<vmem>>, vector<16x1xf32>
    %3 = vector.broadcast %2 : vector<16x1xf32> to vector<16x8xf32>
    %4 = arith.mulf %0, %3 : vector<16x8xf32>
    %cst = arith.constant dense<0.000000e+00> : vector<8xf32>
    %5 = vector.multi_reduction <add>, %4, %cst [0] : vector<16x8xf32> to vector<8xf32>
    %6 = vector.shape_cast %5 : vector<8xf32> to vector<1x8xf32>
    %7 = arith.addf %6, %1 : vector<1x8xf32>
    %8 = arith.negf %7 : vector<1x8xf32>
    %9 = math.exp %8 : vector<1x8xf32>
    %cst_4 = arith.constant 1.000000e+00 : f32
    %10 = vector.broadcast %cst_4 : f32 to vector<1x8xf32>
    %11 = arith.addf %10, %9 : vector<1x8xf32>
    %12 = arith.divf %10, %11 : vector<1x8xf32>
    %c0_5 = arith.constant 0 : index
    %c0_6 = arith.constant 0 : index
    %13 = vector.load %arg2[%c0_5, %c0_6] : memref<1x8xf32, #tpu.memory_space<vmem>>, vector<1x8xf32>
    tpu.vector_store %arg2[%c0_5, %c0_6], %12 {strides = array<i32>} : memref<1x8xf32, #tpu.memory_space<vmem>>, vector<1x8xf32>,
    return
  }
}

</mosaic_0001>

<llo_original>
// kernel: linear_sigmoid.1
$region0: #{linear_sigmoid.1}
  #allocation0 [shape = 'u32[]', space=smem, size = 0x4, offset = 0x4, fixed_abs, tag = 'smem constant byte address 0x4 - core index']
  #allocation1 [shape = 'u32[144,128]{1,0:T(1,128)}', space=vmem, size = 0x12000, scoped, tag = 'internal scratch']
  %s0 = inlined_call_operand.vmem [shape: f32[16,1], index: 0, kind: input, shape index: {}]
  %s1 = inlined_call_operand.vmem [shape: f32[17,8], index: 1, kind: input, shape index: {}]
  %s2 = inlined_call_operand.hbm [shape: f32[1,8], index: 2, kind: output, shape index: {}]
  %s3 = sld [smem:[#allocation0]]
  $region18: #{linear_sigmoid.1} parent=0
    _
  %s5 = ssub.s32 1, %s3
  %s6 = scalar_select 0, %s5, %s3
  $region1: #{linear_sigmoid.1} parent=0
    #allocation2 [shape = 'u8[512]{0}', space=vmem, size = 0x400, scoped, tag = 'output window, operand 0, single buffered']
    #allocation3 [shape = 's32[1]{0}', space=sflag, size = 0x4, scoped, tag = 'scoped memory for linear_sigmoid.1']
    %7 = vsyncpa [#allocation3], 0
    // Predicated region
    $region2: #{linear_sigmoid.1} parent=1 // pred_check
      _
    $region3: #{linear_sigmoid.1} parent=1 // pred_check_branch
      %9 = sbr.rel (0) target = $region5
    $region4: #{linear_sigmoid.1} parent=1 // pred_region
      _
    $region5: #{linear_sigmoid.1} parent=1 // pred_fallthru
      _
    // Predicated region
    $region6: #{linear_sigmoid.1} parent=1 // pred_check
      _
    $region7: #{linear_sigmoid.1} parent=1 // pred_check_branch
      %11 = sbr.rel (0) target = $region9
    $region8: #{linear_sigmoid.1} parent=1 // pred_region
      _
    $region9: #{linear_sigmoid.1} parent=1 // pred_fallthru
      _
    %v12 = vld [vmem:[%s1] sm:$0xff]
    %v13 = vld [vmem:[%s1 + $0x8] sm:$0xff]
    %v14 = vld [vmem:[%s1 + $0x10] sm:$0x1]
    %v15 = vld [vmem:[%s0] sm:$0xff]
    %v16 = vld [vmem:[%s0 + $0x8] sm:$0xff]
    %18 = vset.pattern.permute.xlu0 0
    %19 = vperm.xlu0 %18, %v15
    %v20 = vpop.permute.xlu0 %19
    %23 = vset.pattern.permute.xlu0 0
    %24 = vperm.xlu0 %23, %v16
    %v25 = vpop.permute.xlu0 %24
    %v27 = vmul.f32 %v12, %v20
    %v28 = vmul.f32 %v13, %v25
    %vm29 = vcmask 64512
    %v30 = vsel %vm29, %v27, 0.0
    %v31 = vsel %vm29, %v28, 0.0
    %v32 = vadd.f32 %v30, %v31
    %v33 = vrot.slane %v32, 4
    %v34 = vadd.f32 %v32, %v33
    %v35 = vrot.slane %v34, 2
    %v36 = vadd.f32 %v34, %v35
    %v37 = vrot.slane %v36, 1
    %v38 = vadd.f32 %v36, %v37
    %v39 = vadd.f32 %v38, %v14
    %v40 = vxor.u32 %v39, 2147483648
    %v41 = vmul.f32 %v40, 1.442695
    %v42 = vpow.pop %v41
    %v43 = vadd.f32 %v42, 1.0
    %v44 = vrcp.pop %v43
    %v45 = vmul.f32 1.0, %v44
    %vm46 = vcmask 57344
    %47 = vst.msk [vmem:[#allocation2] sm:$0x1] %vm46, %v45
    // Predicated region
    $region10: #{linear_sigmoid.1} parent=1 // pred_check
      _
    $region11: #{linear_sigmoid.1} parent=1 // pred_check_branch
      %49 = sbr.rel (0) target = $region13
    $region12: #{linear_sigmoid.1} parent=1 // pred_region
      %s51 = ssub.s32 16, 16
      %52 = vsyncadd [#allocation3], %s51
      %s54 = sshll.u32 [#allocation2], 4
      %s55 = int_to_ptr.vmem [resolvable:$true] %s54
      %57 = dma.vmem_to_hbm [thread:$0]  %s55, 16, %s2, [#allocation3]
    $region13: #{linear_sigmoid.1} parent=1 // pred_fallthru
      _
    // Predicated region
    $region14: #{linear_sigmoid.1} parent=1 // pred_check
      _
    $region15: #{linear_sigmoid.1} parent=1 // pred_check_branch
      %59 = sbr.rel (0) target = $region17
    $region16: #{linear_sigmoid.1} parent=1 // pred_region
      %60 = dma.done [#allocation3], 16
    $region17: #{linear_sigmoid.1} parent=1 // pred_fallthru
      _
    %61 = vsyncpa [#allocation3], 1

</llo_original>
